<compile_context>
chip_gen: v7x
topology: tpu7x:2x2x1
jax: 0.10.0
libtpu: 0.0.40
codegen_flags: <defaults>
</compile_context>

<pallas_src>
import functools

import jax
import jax.numpy as jnp
from jax.experimental import pallas as pl
from jax.experimental.pallas import tpu as pltpu

ALPHA = 0.2            # LeakyReLU negative slope
NEG_BIG = -9.0e15      # same masking constant as the PyTorch module
LANE = 128


def _round_up(x, m):
    return ((x + m - 1) // m) * m


def _pick_row_tile(n, pref=256):
    """Row tile: a multiple of 8 that divides n, else the full extent."""
    if n <= pref:
        return n
    for t in (pref, 128, 64, 32, 16, 8):
        if n % t == 0:
            return t
    return n


# ---------------- pass 1: fused projection  h_aug = x @ W_aug ----------------
def _proj_kernel(x_ref, w_ref, h_ref):
    h_ref[...] = jnp.dot(x_ref[...], w_ref[...],
                         preferred_element_type=jnp.float32)


# -------- pass 2: attention logits + mask + softmax + aggregate + ELU --------
def _attn_kernel(h_ref, neigh_ref, adj_ref, m_ref, out_ref, *,
                 tm, idx_self, apply_elu):
    i = pl.program_id(0)
    r0 = pl.multiple_of(i * tm, tm)

    # h_aug is fully VMEM-resident; slicing this tile's rows is an in-VMEM read.
    h_tile = h_ref[pl.ds(r0, tm), :]                         # (tm, f_pad)
    attn_self = h_tile[:, idx_self:idx_self + 1]             # (tm, 1)

    # e[i, j] = attn_self[i] + attn_neigh[j]   (neighbor logits precomputed row)
    e = attn_self + neigh_ref[...]                           # (tm, N)
    e = e * m_ref[...]
    e = jnp.where(e > 0, e, ALPHA * e)                       # LeakyReLU(alpha)
    e = jnp.where(adj_ref[...] > 0, e, NEG_BIG)              # adjacency mask

    # numerically stable row softmax; normalize after the matmul
    e_max = jnp.max(e, axis=1, keepdims=True)
    p = jnp.exp(e - e_max)
    denom = jnp.sum(p, axis=1, keepdims=True)

    hp = jnp.dot(p, h_ref[...], preferred_element_type=jnp.float32)
    hp = hp * pl.reciprocal(denom, approx=False)             # (tm, f_pad)

    if apply_elu:   # concat=True path
        out_ref[...] = jnp.where(hp > 0, hp, jnp.exp(hp) - 1.0)
    else:
        out_ref[...] = hp


def gat_layer(x, adj, M, W, a_self, a_neighs, concat=True):
    """x: (N, F_in), adj/M: (N, N), W: (F_in, F_out), a_self/a_neighs: (F_out, 1).
    Returns (N, F_out) float32, matching GATLayer.forward(concat=concat)."""
    N, f_in = x.shape
    f_out = W.shape[1]

    # Lane-dense padded width; last two padding columns carry the folded
    # attention projections so pass 1 also produces the attention logits.
    f_pad = _round_up(f_out + 2, LANE)
    idx_self = f_pad - 2
    idx_neigh = f_pad - 1

    W = W.astype(jnp.float32)
    W_aug = jnp.zeros((f_in, f_pad), jnp.float32)
    W_aug = W_aug.at[:, :f_out].set(W)
    W_aug = W_aug.at[:, idx_self].set((W @ a_self.astype(jnp.float32))[:, 0])
    W_aug = W_aug.at[:, idx_neigh].set((W @ a_neighs.astype(jnp.float32))[:, 0])

    tm = _pick_row_tile(N)
    grid = (pl.cdiv(N, tm),)
    params = pltpu.CompilerParams(dimension_semantics=("parallel",))

    # --- pass 1: h_aug = x @ W_aug (row-tiled, parallel across cores) ---
    h_aug = pl.pallas_call(
        _proj_kernel,
        out_shape=jax.ShapeDtypeStruct((N, f_pad), jnp.float32),
        grid=grid,
        in_specs=[
            pl.BlockSpec((tm, f_in), lambda i: (i, 0)),
            pl.BlockSpec((f_in, f_pad), lambda i: (0, 0)),
        ],
        out_specs=pl.BlockSpec((tm, f_pad), lambda i: (i, 0)),
        compiler_params=params,
    )(x.astype(jnp.float32), W_aug)

    # neighbor logits as one lane-dense (1, N) row, built once (layout plumbing,
    # avoids a per-tile column->row relayout on the XLU inside pass 2)
    neigh_row = h_aug[:, idx_neigh].reshape(1, N)

    # --- pass 2: masked attention softmax + aggregation (+ ELU) ---
    out_pad = pl.pallas_call(
        functools.partial(_attn_kernel, tm=tm, idx_self=idx_self,
                          apply_elu=concat),
        out_shape=jax.ShapeDtypeStruct((N, f_pad), jnp.float32),
        grid=grid,
        in_specs=[
            pl.BlockSpec((N, f_pad), lambda i: (0, 0)),   # h_aug, VMEM-resident
            pl.BlockSpec((1, N), lambda i: (0, 0)),       # neighbor-logit row
            pl.BlockSpec((tm, N), lambda i: (i, 0)),      # adj row tile
            pl.BlockSpec((tm, N), lambda i: (i, 0)),      # M row tile
        ],
        out_specs=pl.BlockSpec((tm, f_pad), lambda i: (i, 0)),
        compiler_params=params,
    )(h_aug, neigh_row, adj.astype(jnp.float32), M.astype(jnp.float32))

    return out_pad[:, :f_out]


def xavier_uniform(key, shape, gain):
    fan_in, fan_out = shape[0], shape[1]
    bound = gain * jnp.sqrt(6.0 / (fan_in + fan_out))
    return jax.random.uniform(key, shape, jnp.float32, -bound, bound)


def reference(x, adj, M, W, a_self, a_neighs):
    h = x @ W
    e = (h @ a_self) + (h @ a_neighs).T
    e = e * M
    e = jnp.where(e > 0, e, ALPHA * e)
    e = jnp.where(adj > 0, e, NEG_BIG)
    attention = jax.nn.softmax(e, axis=1)
    h_prime = attention @ h
    return jnp.where(h_prime > 0, h_prime, jnp.exp(h_prime) - 1.0)


if __name__ == "__main__":
    N, F_IN, F_OUT = 128, 64, 32
    key = jax.random.PRNGKey(0)
    k1, k2, k3, k4, k5, k6 = jax.random.split(key, 6)

    # deterministic "parameters" (xavier_uniform, gain=1.414 as in __init__)
    W = xavier_uniform(k1, (F_IN, F_OUT), 1.414)
    a_self = xavier_uniform(k2, (F_OUT, 1), 1.414)
    a_neighs = xavier_uniform(k3, (F_OUT, 1), 1.414)

    # deterministic inputs
    x = jax.random.normal(k4, (N, F_IN), jnp.float32)
    adj = (jax.random.uniform(k5, (N, N)) > 0.7).astype(jnp.float32)
    adj = jnp.minimum(adj + jnp.eye(N, dtype=jnp.float32), 1.0)  # self loops
    M = jax.random.uniform(k6, (N, N), jnp.float32)

    out = gat_layer(x, adj, M, W, a_self, a_neighs)
    out = jax.block_until_ready(out)

    ref = reference(x, adj, M, W, a_self, a_neighs)
    assert out.shape == (N, F_OUT)
    assert jnp.allclose(out, ref, atol=1e-4, rtol=1e-4), "mismatch vs reference"

    print("KERNEL_OK")
</pallas_src>

<mosaic_0001>
module attributes {stable_mosaic.version = 11 : i64} {
  func.func @_proj_kernel(%arg0: i32, %arg1: memref<128x64xf32, #tpu.memory_space<vmem>>, %arg2: memref<64x128xf32, #tpu.memory_space<vmem>>, %arg3: memref<128x128xf32, #tpu.memory_space<vmem>>) attributes {dimension_semantics = [#tpu.dimension_semantics<parallel>], iteration_bounds = array<i64: 1>, scalar_prefetch = 0 : i64, scratch_operands = 0 : i64, tpu.core_type = #tpu.core_type<tc>, window_params = [{transform_indices = @transform_0, window_bounds = array<i64: 128, 64>}, {pipeline_mode = #tpu.pipeline_mode<synchronous>, transform_indices = @transform_1, window_bounds = array<i64: 64, 128>}, {transform_indices = @transform_2, window_bounds = array<i64: 128, 128>}]} {
    %c0 = arith.constant 0 : index
    %c0_0 = arith.constant 0 : index
    %0 = vector.load %arg1[%c0, %c0_0] : memref<128x64xf32, #tpu.memory_space<vmem>>, vector<128x64xf32>
    %c0_1 = arith.constant 0 : index
    %c0_2 = arith.constant 0 : index
    %1 = vector.load %arg2[%c0_1, %c0_2] : memref<64x128xf32, #tpu.memory_space<vmem>>, vector<64x128xf32>
    %cst = arith.constant dense<0.000000e+00> : vector<128x128xf32>
    %2 = tpu.matmul %0, %1, %cst {dimension_numbers = #tpu.dot_dimension_numbers<[1], [0], [0], [1], [0, 0, 1, 1], [], []>} : vector<128x64xf32>, vector<64x128xf32>, vector<128x128xf32> -> vector<128x128xf32>
    %c0_3 = arith.constant 0 : index
    %c0_4 = arith.constant 0 : index
    %3 = vector.load %arg3[%c0_3, %c0_4] : memref<128x128xf32, #tpu.memory_space<vmem>>, vector<128x128xf32>
    tpu.vector_store %arg3[%c0_3, %c0_4], %2 {strides = array<i32>} : memref<128x128xf32, #tpu.memory_space<vmem>>, vector<128x128xf32>,
    return
  }
  func.func @transform_0(%arg0: i32) -> (i32, i32) {
    %c0_i32 = arith.constant 0 : i32
    %c0_i32_0 = arith.constant 0 : i32
    return %arg0, %c0_i32 : i32, i32
  }
  func.func @transform_1(%arg0: i32) -> (i32, i32) {
    %c0_i32 = arith.constant 0 : i32
    %c0_i32_0 = arith.constant 0 : i32
    %c0_i32_1 = arith.constant 0 : i32
    return %c0_i32, %c0_i32_0 : i32, i32
  }
  func.func @transform_2(%arg0: i32) -> (i32, i32) {
    %c0_i32 = arith.constant 0 : i32
    %c0_i32_0 = arith.constant 0 : i32
    return %arg0, %c0_i32 : i32, i32
  }
}

</mosaic_0001>

<llo_original>
// kernel: tpu_custom_call.1
$region0: #{tpu_custom_call.1}
  #allocation0 [shape = 'u32[]', space=smem, size = 0x4, offset = 0x4, fixed_abs, tag = 'smem constant byte address 0x4 - core index']
  #allocation1 [shape = 'u32[144,128]{1,0:T(1,128)}', space=vmem, size = 0x12000, scoped, tag = 'internal scratch']
  %s0 = inlined_call_operand.vmem [shape: f32[128,64], index: 0, kind: input, shape index: {}]
  %s1 = inlined_call_operand.vmem [shape: f32[64,128], index: 1, kind: input, shape index: {}]
  %s2 = inlined_call_operand.hbm [shape: f32[128,128], index: 2, kind: output, shape index: {}]
  %s3 = sld [smem:[#allocation0]]
  $region18: #{tpu_custom_call.1} parent=0
    _
  %s5 = ssub.s32 1, %s3
  %s6 = scalar_select 0, %s5, %s3
  $region1: #{tpu_custom_call.1} parent=0
    #allocation2 [shape = 'u8[65536]{0}', space=vmem, size = 0x10000, scoped, tag = 'output window, operand 0, single buffered']
    #allocation3 [shape = 's32[1]{0}', space=sflag, size = 0x4, scoped, tag = 'scoped memory for tpu_custom_call.1']
    %7 = vsyncpa [#allocation3], 0
    // Predicated region
    $region2: #{tpu_custom_call.1} parent=1 // pred_check
      _
    $region3: #{tpu_custom_call.1} parent=1 // pred_check_branch
      %9 = sbr.rel (0) target = $region5
    $region4: #{tpu_custom_call.1} parent=1 // pred_region
      _
    $region5: #{tpu_custom_call.1} parent=1 // pred_fallthru
      _
    // Predicated region
    $region6: #{tpu_custom_call.1} parent=1 // pred_check
      _
    $region7: #{tpu_custom_call.1} parent=1 // pred_check_branch
      %11 = sbr.rel (0) target = $region9
    $region8: #{tpu_custom_call.1} parent=1 // pred_region
      _
    $region9: #{tpu_custom_call.1} parent=1 // pred_fallthru
      _
    %v12 = vld [vmem:[%s0] sm:$0xff]
    %v13 = vld [vmem:[%s0 + $0x8] sm:$0xff]
    %v14 = vld [vmem:[%s0 + $0x10] sm:$0xff]
    %v15 = vld [vmem:[%s0 + $0x18] sm:$0xff]
    %v16 = vld [vmem:[%s0 + $0x20] sm:$0xff]
    %v17 = vld [vmem:[%s0 + $0x28] sm:$0xff]
    %v18 = vld [vmem:[%s0 + $0x30] sm:$0xff]
    %v19 = vld [vmem:[%s0 + $0x38] sm:$0xff]
    %v20 = vld [vmem:[%s0 + $0x40] sm:$0xff]
    %v21 = vld [vmem:[%s0 + $0x48] sm:$0xff]
    %v22 = vld [vmem:[%s0 + $0x50] sm:$0xff]
    %v23 = vld [vmem:[%s0 + $0x58] sm:$0xff]
    %v24 = vld [vmem:[%s0 + $0x60] sm:$0xff]
    %v25 = vld [vmem:[%s0 + $0x68] sm:$0xff]
    %v26 = vld [vmem:[%s0 + $0x70] sm:$0xff]
    %v27 = vld [vmem:[%s0 + $0x78] sm:$0xff]
    %v28 = vld [vmem:[%s1] sm:$0xff]
    %v29 = vld [vmem:[%s1 + $0x8] sm:$0xff]
    %v30 = vld [vmem:[%s1 + $0x10] sm:$0xff]
    %v31 = vld [vmem:[%s1 + $0x18] sm:$0xff]
    %v32 = vld [vmem:[%s1 + $0x20] sm:$0xff]
    %v33 = vld [vmem:[%s1 + $0x28] sm:$0xff]
    %v34 = vld [vmem:[%s1 + $0x30] sm:$0xff]
    %v35 = vld [vmem:[%s1 + $0x38] sm:$0xff]
    %vm36 = vcmask 523264
    %v38 = vsel %vm36, %v12, 0
    %v41 = vsel %vm36, %v13, 0
    %v44 = vsel %vm36, %v14, 0
    %v47 = vsel %vm36, %v15, 0
    %v50 = vsel %vm36, %v16, 0
    %v53 = vsel %vm36, %v17, 0
    %v56 = vsel %vm36, %v18, 0
    %v59 = vsel %vm36, %v19, 0
    %v62 = vsel %vm36, %v20, 0
    %v65 = vsel %vm36, %v21, 0
    %v68 = vsel %vm36, %v22, 0
    %v71 = vsel %vm36, %v23, 0
    %v74 = vsel %vm36, %v24, 0
    %v77 = vsel %vm36, %v25, 0
    %v80 = vsel %vm36, %v26, 0
    %v83 = vsel %vm36, %v27, 0
    %85 = vmatprep.subr.mxu0 0.0
    %86 = vmatpush1.msra.mxu0 %v28
    %87 = vmatprep.subr.mxu0 0.0
    %88 = vmatpush1.msra.mxu0 %v29
    %89 = vmatprep.subr.mxu0 0.0
    %90 = vmatpush1.msra.mxu0 %v30
    %91 = vmatprep.subr.mxu0 0.0
    %92 = vmatpush1.msra.mxu0 %v31
    %93 = vmatprep.subr.mxu0 0.0
    %94 = vmatpush1.msra.mxu0 %v32
    %95 = vmatprep.subr.mxu0 0.0
    %96 = vmatpush1.msra.mxu0 %v33
    %97 = vmatprep.subr.mxu0 0.0
    %98 = vmatpush1.msra.mxu0 %v34
    %99 = vmatprep.subr.mxu0 0.0
    %100 = vmatpush1.msra.mxu0 %v35
    %101 = vmatprep.subr.mxu0 0.0
    %102 = vmatpush1.msra.mxu0 0.0
    %103 = vmatprep.subr.mxu0 0.0
    %104 = vmatpush1.msra.mxu0 0.0
    %105 = vmatprep.subr.mxu0 0.0
    %106 = vmatpush1.msra.mxu0 0.0
    %107 = vmatprep.subr.mxu0 0.0
    %108 = vmatpush1.msra.mxu0 0.0
    %109 = vmatprep.subr.mxu0 0.0
    %110 = vmatpush1.msra.mxu0 0.0
    %111 = vmatprep.subr.mxu0 0.0
    %112 = vmatpush1.msra.mxu0 0.0
    %113 = vmatprep.subr.mxu0 0.0
    %114 = vmatpush1.msra.mxu0 0.0
    %115 = vmatprep.subr.mxu0 0.0
    %116 = vmatpush1.msra.mxu0 0.0
    %117 = vmatprep.subr.mxu0 0.0
    %118 = vmatpush1.msra.mxu0 0.0
    %119 = vmatprep.subr.mxu0 0.0
    %120 = vmatpush1.msra.mxu0 0.0
    %121 = vmatprep.subr.mxu0 0.0
    %122 = vmatpush1.msra.mxu0 0.0
    %123 = vmatprep.subr.mxu0 0.0
    %124 = vmatpush1.msra.mxu0 0.0
    %125 = vmatprep.subr.mxu0 0.0
    %126 = vmatpush1.msra.mxu0 0.0
    %127 = vmatprep.subr.mxu0 0.0
    %128 = vmatpush1.msra.mxu0 0.0
    %129 = vmatprep.subr.mxu0 0.0
    %130 = vmatpush1.msra.mxu0 0.0
    %131 = vmatprep.subr.mxu0 0.0
    %132 = vmatpush1.msra.mxu0 0.0
    %133 = vmatprep.subr.mxu0 0.0
    %134 = vmatpush1.msra.mxu0 0.0
    %135 = vmatprep.subr.mxu0 0.0
    %136 = vmatpush1.msra.mxu0 0.0
    %137 = vmatprep.subr.mxu0 0.0
    %138 = vmatpush1.msra.mxu0 0.0
    %139 = vmatprep.subr.mxu0 0.0
    %140 = vmatpush1.msra.mxu0 0.0
    %141 = vmatprep.subr.mxu0 0.0
    %142 = vmatpush1.msra.mxu0 0.0
    %143 = vmatprep.subr.mxu0 0.0
    %144 = vmatpush1.msra.mxu0 0.0
    %145 = vmatprep.subr.mxu0 0.0
    %146 = vmatpush1.msra.mxu0 0.0
    %147 = vmatprep.subr.mxu0 0.0
    %148 = vmatpush1.msra.mxu0 0.0
    %149 = vmatprep.mubr.f32.mxu0 0.0
    %150 = vmatmul.mubr.f32.gmra.mrb[0].mxu0 %v38
    %v151 = vpop.f32.mrb[0].mxu0
    %v152 = vadd.f32 0.0, %v151
    %v153 = vpop.f32.mrb[0].mxu0
    %154 = vmatprep.mubr.f32.mxu0 0.0
    %155 = vmatmul.mubr.f32.gmra.mrb[0].mxu0 %v41
    %v156 = vpop.f32.mrb[0].mxu0
    %v157 = vadd.f32 0.0, %v156
    %v158 = vpop.f32.mrb[0].mxu0
    %159 = vmatprep.mubr.f32.mxu0 0.0
    %160 = vmatmul.mubr.f32.gmra.mrb[0].mxu0 %v44
    %v161 = vpop.f32.mrb[0].mxu0
    %v162 = vadd.f32 0.0, %v161
    %v163 = vpop.f32.mrb[0].mxu0
    %164 = vmatprep.mubr.f32.mxu0 0.0
    %165 = vmatmul.mubr.f32.gmra.mrb[0].mxu0 %v47
    %v166 = vpop.f32.mrb[0].mxu0
    %v167 = vadd.f32 0.0, %v166
    %v168 = vpop.f32.mrb[0].mxu0
    %169 = vmatprep.mubr.f32.mxu0 0.0
    %170 = vmatmul.mubr.f32.gmra.mrb[0].mxu0 %v50
    %v171 = vpop.f32.mrb[0].mxu0
    %v172 = vadd.f32 0.0, %v171
    %v173 = vpop.f32.mrb[0].mxu0
    %174 = vmatprep.mubr.f32.mxu0 0.0
    %175 = vmatmul.mubr.f32.gmra.mrb[0].mxu0 %v53
    %v176 = vpop.f32.mrb[0].mxu0
    %v177 = vadd.f32 0.0, %v176
    %v178 = vpop.f32.mrb[0].mxu0
    %179 = vmatprep.mubr.f32.mxu0 0.0
    %180 = vmatmul.mubr.f32.gmra.mrb[0].mxu0 %v56
    %v181 = vpop.f32.mrb[0].mxu0
    %v182 = vadd.f32 0.0, %v181
    %v183 = vpop.f32.mrb[0].mxu0
    %184 = vmatprep.mubr.f32.mxu0 0.0
    %185 = vmatmul.mubr.f32.gmra.mrb[0].mxu0 %v59
    %v186 = vpop.f32.mrb[0].mxu0
    %v187 = vadd.f32 0.0, %v186
    %v188 = vpop.f32.mrb[0].mxu0
    %189 = vmatprep.mubr.f32.mxu0 0.0
    %190 = vmatmul.mubr.f32.gmra.mrb[0].mxu0 %v62
    %v191 = vpop.f32.mrb[0].mxu0
    %v192 = vadd.f32 0.0, %v191
    %v193 = vpop.f32.mrb[0].mxu0
    %194 = vmatprep.mubr.f32.mxu0 0.0
    %195 = vmatmul.mubr.f32.gmra.mrb[0].mxu0 %v65
    %v196 = vpop.f32.mrb[0].mxu0
    %v197 = vadd.f32 0.0, %v196
    %v198 = vpop.f32.mrb[0].mxu0
    %199 = vmatprep.mubr.f32.mxu0 0.0
    %200 = vmatmul.mubr.f32.gmra.mrb[0].mxu0 %v68
    %v201 = vpop.f32.mrb[0].mxu0
    %v202 = vadd.f32 0.0, %v201
    %v203 = vpop.f32.mrb[0].mxu0
    %204 = vmatprep.mubr.f32.mxu0 0.0
    %205 = vmatmul.mubr.f32.gmra.mrb[0].mxu0 %v71
    %v206 = vpop.f32.mrb[0].mxu0
    %v207 = vadd.f32 0.0, %v206
    %v208 = vpop.f32.mrb[0].mxu0
    %209 = vmatprep.mubr.f32.mxu0 0.0
    %210 = vmatmul.mubr.f32.gmra.mrb[0].mxu0 %v74
    %v211 = vpop.f32.mrb[0].mxu0
    %v212 = vadd.f32 0.0, %v211
    %v213 = vpop.f32.mrb[0].mxu0
    %214 = vmatprep.mubr.f32.mxu0 0.0
    %215 = vmatmul.mubr.f32.gmra.mrb[0].mxu0 %v77
    %v216 = vpop.f32.mrb[0].mxu0
    %v217 = vadd.f32 0.0, %v216
    %v218 = vpop.f32.mrb[0].mxu0
    %219 = vmatprep.mubr.f32.mxu0 0.0
    %220 = vmatmul.mubr.f32.gmra.mrb[0].mxu0 %v80
    %v221 = vpop.f32.mrb[0].mxu0
    %v222 = vadd.f32 0.0, %v221
    %v223 = vpop.f32.mrb[0].mxu0
    %224 = vmatprep.mubr.f32.mxu0 0.0
    %225 = vmatmul.mubr.f32.gmra.mrb[0].mxu0 %v83
    %v226 = vpop.f32.mrb[0].mxu0
    %v227 = vadd.f32 0.0, %v226
    %v228 = vpop.f32.mrb[0].mxu0
    %229 = vdwg.mxu0
    %230 = vst [vmem:[#allocation2] sm:$0xff] %v152
    %231 = vst [vmem:[#allocation2 + $0x8] sm:$0xff] %v157
    %232 = vst [vmem:[#allocation2 + $0x10] sm:$0xff] %v162
    %233 = vst [vmem:[#allocation2 + $0x18] sm:$0xff] %v167
    %234 = vst [vmem:[#allocation2 + $0x20] sm:$0xff] %v172
    %235 = vst [vmem:[#allocation2 + $0x28] sm:$0xff] %v177
    %236 = vst [vmem:[#allocation2 + $0x30] sm:$0xff] %v182
    %237 = vst [vmem:[#allocation2 + $0x38] sm:$0xff] %v187
    %238 = vst [vmem:[#allocation2 + $0x40] sm:$0xff] %v192
    %239 = vst [vmem:[#allocation2 + $0x48] sm:$0xff] %v197
    %240 = vst [vmem:[#allocation2 + $0x50] sm:$0xff] %v202
    %241 = vst [vmem:[#allocation2 + $0x58] sm:$0xff] %v207
    %242 = vst [vmem:[#allocation2 + $0x60] sm:$0xff] %v212
    %243 = vst [vmem:[#allocation2 + $0x68] sm:$0xff] %v217
    %244 = vst [vmem:[#allocation2 + $0x70] sm:$0xff] %v222
    %245 = vst [vmem:[#allocation2 + $0x78] sm:$0xff] %v227
    // Predicated region
    $region10: #{tpu_custom_call.1} parent=1 // pred_check
      _
    $region11: #{tpu_custom_call.1} parent=1 // pred_check_branch
      %247 = sbr.rel (0) target = $region13
    $region12: #{tpu_custom_call.1} parent=1 // pred_region
      %s249 = ssub.s32 2048, 2048
      %250 = vsyncadd [#allocation3], %s249
      %s251 = sshll.u32 [#allocation2], 4
      %s252 = int_to_ptr.vmem [resolvable:$true] %s251
      %257 = dma.vmem_to_hbm [thread:$0]  %s252, 2048, %s2, [#allocation3], 128, 128, 8
    $region13: #{tpu_custom_call.1} parent=1 // pred_fallthru
      _
    // Predicated region
    $region14: #{tpu_custom_call.1} parent=1 // pred_check
      _
    $region15: #{tpu_custom_call.1} parent=1 // pred_check_branch
      %259 = sbr.rel (0) target = $region17
    $region16: #{tpu_custom_call.1} parent=1 // pred_region
      %260 = dma.done [#allocation3], 2048
    $region17: #{tpu_custom_call.1} parent=1 // pred_fallthru
      _
    %261 = vsyncpa [#allocation3], 1

</llo_original>
